<compile_context>
chip_gen: v7x
topology: tpu7x:2x2x1
jax: 0.10.0
libtpu: 0.0.40
codegen_flags: <defaults>
</compile_context>

<pallas_src>
import functools

import jax
import jax.numpy as jnp
import numpy as np
from jax.experimental import pallas as pl
from jax.experimental.pallas import tpu as pltpu

MAX_LOG_STD = 2.0
MIN_LOG_STD = -5.0

_LANE = 128
_SUBLANE = 8
_MAX_BATCH_TILE = 1024


def _round_up(x, m):
    return ((x + m - 1) // m) * m


# -----------------------------------------------------------------------------
# Parameter init (PyTorch nn.Linear-style), kept as a flat per-layer list so it
# mirrors the original module's tensors.
# -----------------------------------------------------------------------------
def _linear_params(key, in_dim, out_dim, dtype=jnp.float32):
    kw, kb = jax.random.split(key)
    bound = 1.0 / float(np.sqrt(in_dim))
    w = jax.random.uniform(kw, (in_dim, out_dim), dtype, -bound, bound)
    b = jax.random.uniform(kb, (1, out_dim), dtype, -bound, bound)
    return w, b


def init_actor_critic_params(key, actor_in_dims, actor_hidden_sizes,
                             actor_out_dims, critic_in_dims,
                             critic_hidden_sizes, critic_out_dim=1):
    params = []
    d = actor_in_dims
    for h in actor_hidden_sizes:
        key, sub = jax.random.split(key)
        params.extend(_linear_params(sub, d, h))
        d = h
    key, sub = jax.random.split(key)
    params.extend(_linear_params(sub, d, actor_out_dims))   # mean head
    key, sub = jax.random.split(key)
    params.extend(_linear_params(sub, d, actor_out_dims))   # log_std head

    d = critic_in_dims
    for h in critic_hidden_sizes:
        key, sub = jax.random.split(key)
        params.extend(_linear_params(sub, d, h))
        d = h
    key, sub = jax.random.split(key)
    params.extend(_linear_params(sub, d, critic_out_dim))   # value head
    return params


# -----------------------------------------------------------------------------
# One-time packing of the per-layer params into two lane-dense bf16 slabs.
# -----------------------------------------------------------------------------
def pack_actor_critic_params(params, actor_hidden_sizes, critic_hidden_sizes):
    n_ah = len(actor_hidden_sizes)
    n_ch = len(critic_hidden_sizes)
    assert n_ah == n_ch and n_ah >= 1, "fused kernel assumes equal, >=1 trunk depth"

    it = iter(params)
    a_layers = [(next(it), next(it)) for _ in range(n_ah)]
    w_mean, b_mean = next(it), next(it)
    w_ls, b_ls = next(it), next(it)
    c_layers = [(next(it), next(it)) for _ in range(n_ch)]
    w_v, b_v = next(it), next(it)

    d_in_a = a_layers[0][0].shape[0]
    d_in_c = c_layers[0][0].shape[0]
    assert d_in_a == d_in_c, "fused layer-0 requires actor_in_dims == critic_in_dims"

    act_dim = w_mean.shape[1]
    val_dim = w_v.shape[1]
    head_out = 2 * act_dim + val_dim

    joint_widths = [a[0].shape[1] + c[0].shape[1]
                    for a, c in zip(a_layers, c_layers)]
    pad = _round_up(max([d_in_a, head_out, _LANE] + joint_widths), _LANE)

    n_mats = n_ah + 1
    w_slab = np.zeros((n_mats, pad, pad), np.float32)   # exact zeros off-block
    b_slab = np.zeros((n_mats, 1, pad), np.float32)

    # Layer 0: x @ [aW0 | cW0]
    aW0, ab0 = a_layers[0]
    cW0, cb0 = c_layers[0]
    ha, hc = aW0.shape[1], cW0.shape[1]
    w_slab[0, :d_in_a, :ha] = np.asarray(aW0)
    w_slab[0, :d_in_a, ha:ha + hc] = np.asarray(cW0)
    b_slab[0, 0, :ha] = np.asarray(ab0)[0]
    b_slab[0, 0, ha:ha + hc] = np.asarray(cb0)[0]

    # Deeper trunk layers: block-diagonal [aW_i, 0; 0, cW_i]
    for i in range(1, n_ah):
        aW, ab = a_layers[i]
        cW, cb = c_layers[i]
        ha_in, ha_out = aW.shape
        hc_in, hc_out = cW.shape
        w_slab[i, :ha_in, :ha_out] = np.asarray(aW)
        w_slab[i, ha_in:ha_in + hc_in, ha_out:ha_out + hc_out] = np.asarray(cW)
        b_slab[i, 0, :ha_out] = np.asarray(ab)[0]
        b_slab[i, 0, ha_out:ha_out + hc_out] = np.asarray(cb)[0]

    # Fused head: [h_actor | h_critic] @ [[w_mean, w_ls, 0], [0, 0, w_v]]
    ha_last = a_layers[-1][0].shape[1]
    hc_last = c_layers[-1][0].shape[1]
    w_slab[n_ah, :ha_last, :act_dim] = np.asarray(w_mean)
    w_slab[n_ah, :ha_last, act_dim:2 * act_dim] = np.asarray(w_ls)
    w_slab[n_ah, ha_last:ha_last + hc_last, 2 * act_dim:head_out] = np.asarray(w_v)
    b_slab[n_ah, 0, :act_dim] = np.asarray(b_mean)[0]
    b_slab[n_ah, 0, act_dim:2 * act_dim] = np.asarray(b_ls)[0]
    b_slab[n_ah, 0, 2 * act_dim:head_out] = np.asarray(b_v)[0]

    # bf16 slabs: MXU-native operands, half the weight DMA. Zeros stay exact.
    return (jnp.asarray(w_slab).astype(jnp.bfloat16),
            jnp.asarray(b_slab).astype(jnp.bfloat16),
            act_dim, val_dim)


# -----------------------------------------------------------------------------
# Pallas kernel: whole fused MLP for one batch tile.
# -----------------------------------------------------------------------------
def _make_kernel(n_hidden, act_dim, d_in):
    def kernel(x_ref, w_ref, b_ref, o_ref):
        # Layer 0: x is NOT lane-padded, so contract against the first d_in
        # weight rows only (bf16 operands, f32 accumulate).
        h = jnp.tanh(
            jnp.dot(x_ref[...].astype(jnp.bfloat16), w_ref[0, :d_in, :],
                    preferred_element_type=jnp.float32)
            + b_ref[0].astype(jnp.float32))
        for i in range(1, n_hidden):                        # joint trunk
            h = jnp.tanh(
                jnp.dot(h.astype(jnp.bfloat16), w_ref[i],
                        preferred_element_type=jnp.float32)
                + b_ref[i].astype(jnp.float32))
        # Fused heads: cols [0:A]=mean, [A:2A]=log_std, [2A:2A+V]=value, rest 0.
        y = (jnp.dot(h.astype(jnp.bfloat16), w_ref[n_hidden],
                     preferred_element_type=jnp.float32)
             + b_ref[n_hidden].astype(jnp.float32))
        col = jax.lax.broadcasted_iota(jnp.int32, y.shape, 1)
        is_log_std = (col >= act_dim) & (col < 2 * act_dim)
        y = jnp.where(is_log_std,
                      jnp.exp(jnp.clip(y, MIN_LOG_STD, MAX_LOG_STD)),
                      y)
        o_ref[...] = y.astype(o_ref.dtype)                  # one lane-dense store
    return kernel


@functools.partial(jax.jit, static_argnames=("act_dim", "val_dim", "n_hidden"))
def actor_critic_forward(x, w_slab, b_slab, *, act_dim, val_dim, n_hidden):
    """Returns one contiguous (b_rows, 2*act_dim + val_dim) slab:
    [:, :A]=mean, [:, A:2A]=std, [:, 2A:2A+V]=value."""
    b_rows, d_in = x.shape
    n_mats, pad, _ = w_slab.shape
    assert n_mats == n_hidden + 1
    head_out = 2 * act_dim + val_dim

    # Adaptive batch tiling: <=7 rows of padding, and >=2 grid points whenever
    # b_rows >= 16 so the "parallel" axis shards across both v7x TensorCores.
    n_tiles = max(pl.cdiv(b_rows, _MAX_BATCH_TILE), 2 if b_rows >= 16 else 1)
    tb = _round_up(pl.cdiv(b_rows, n_tiles), _SUBLANE)
    b_pad = _round_up(b_rows, tb)

    x = x.astype(jnp.float32)
    if b_pad != b_rows:
        x = jnp.zeros((b_pad, d_in), jnp.float32).at[:b_rows].set(x)

    out = pl.pallas_call(
        _make_kernel(n_hidden, act_dim, d_in),
        out_shape=jax.ShapeDtypeStruct((b_pad, pad), jnp.float32),
        grid=(b_pad // tb,),
        in_specs=[
            # x tile: last dim == full array dim (d_in), so no lane padding.
            pl.BlockSpec((tb, d_in), lambda i: (i, 0)),
            # Grid-invariant weight/bias slabs: fetched once.
            pl.BlockSpec((n_mats, pad, pad), lambda i: (0, 0, 0)),
            pl.BlockSpec((n_mats, 1, pad), lambda i: (0, 0, 0)),
        ],
        out_specs=pl.BlockSpec((tb, pad), lambda i: (i, 0)),
        compiler_params=pltpu.CompilerParams(
            dimension_semantics=("parallel",)),
    )(x, w_slab, b_slab)

    # Single contiguous slice of the lane-dense slab; splitting happens outside
    # the jitted latency path.
    return out[:b_rows, :head_out]


def split_heads(head, act_dim, val_dim):
    return (head[:, :act_dim],
            head[:, act_dim:2 * act_dim],
            head[:, 2 * act_dim:2 * act_dim + val_dim])


if __name__ == "__main__":
    # Small config consistent with the module:
    #   obs dim 16, actor hidden (32, 32), action dim 4,
    #   critic obs dim 16, critic hidden (32, 32), value dim 1, batch 8.
    B = 8
    actor_in_dims = 16
    actor_hidden_sizes = (32, 32)
    actor_out_dims = 4
    critic_in_dims = 16
    critic_hidden_sizes = (32, 32)
    critic_out_dim = 1

    key = jax.random.PRNGKey(0)
    key, pkey, xkey = jax.random.split(key, 3)

    params = init_actor_critic_params(
        pkey, actor_in_dims, actor_hidden_sizes, actor_out_dims,
        critic_in_dims, critic_hidden_sizes, critic_out_dim)
    x = jax.random.normal(xkey, (B, actor_in_dims), jnp.float32)

    w_slab, b_slab, act_dim, val_dim = pack_actor_critic_params(
        params, actor_hidden_sizes, critic_hidden_sizes)

    head = actor_critic_forward(
        x, w_slab, b_slab,
        act_dim=act_dim, val_dim=val_dim, n_hidden=len(actor_hidden_sizes))
    jax.block_until_ready(head)
    mean, std, value = split_heads(head, act_dim, val_dim)

    # ---- float64 numpy reference of the original PyTorch forward ----
    def ref_forward(x_np, params_np, n_ah, n_ch):
        it = iter(params_np)
        h = x_np
        for _ in range(n_ah):
            w, b = next(it), next(it)
            h = np.tanh(h @ w + b)
        wm, bm = next(it), next(it)
        ws, bs = next(it), next(it)
        mean_r = h @ wm + bm
        std_r = np.exp(np.clip(h @ ws + bs, MIN_LOG_STD, MAX_LOG_STD))
        c = x_np
        for _ in range(n_ch):
            w, b = next(it), next(it)
            c = np.tanh(c @ w + b)
        wv, bv = next(it), next(it)
        return mean_r, std_r, c @ wv + bv

    params_np = [np.asarray(p, dtype=np.float64) for p in params]
    x_np = np.asarray(x, dtype=np.float64)
    mean_r, std_r, value_r = ref_forward(
        x_np, params_np, len(actor_hidden_sizes), len(critic_hidden_sizes))

    assert mean.shape == (B, actor_out_dims)
    assert std.shape == (B, actor_out_dims)
    assert value.shape == (B, critic_out_dim)
    # Tolerance covers the bf16-operand / f32-accumulate MXU path.
    np.testing.assert_allclose(np.asarray(mean), mean_r, rtol=2e-2, atol=2e-2)
    np.testing.assert_allclose(np.asarray(std), std_r, rtol=2e-2, atol=2e-2)
    np.testing.assert_allclose(np.asarray(value), value_r, rtol=2e-2, atol=2e-2)

    print("KERNEL_OK")
</pallas_src>

<mosaic_0001>
module attributes {stable_mosaic.version = 11 : i64} {
  func.func @kernel(%arg0: i32, %arg1: memref<8x16xf32, #tpu.memory_space<vmem>>, %arg2: memref<3x128x128xbf16, #tpu.memory_space<vmem>>, %arg3: memref<3x1x128xbf16, #tpu.memory_space<vmem>>, %arg4: memref<8x128xf32, #tpu.memory_space<vmem>>) attributes {dimension_semantics = [#tpu.dimension_semantics<parallel>], iteration_bounds = array<i64: 1>, scalar_prefetch = 0 : i64, scratch_operands = 0 : i64, tpu.core_type = #tpu.core_type<tc>, window_params = [{transform_indices = @transform_0, window_bounds = array<i64: 8, 16>}, {pipeline_mode = #tpu.pipeline_mode<synchronous>, transform_indices = @transform_1, window_bounds = array<i64: 3, 128, 128>}, {pipeline_mode = #tpu.pipeline_mode<synchronous>, transform_indices = @transform_2, window_bounds = array<i64: 3, 1, 128>}, {transform_indices = @transform_3, window_bounds = array<i64: 8, 128>}]} {
    %c0 = arith.constant 0 : index
    %c0_0 = arith.constant 0 : index
    %0 = vector.load %arg1[%c0, %c0_0] : memref<8x16xf32, #tpu.memory_space<vmem>>, vector<8x16xf32>
    %1 = arith.truncf %0 : vector<8x16xf32> to vector<8x16xbf16>
    %c0_1 = arith.constant 0 : index
    %c0_2 = arith.constant 0 : index
    %c0_3 = arith.constant 0 : index
    %2 = vector.load %arg2[%c0_1, %c0_2, %c0_3] : memref<3x128x128xbf16, #tpu.memory_space<vmem>>, vector<1x16x128xbf16>
    %3 = vector.shape_cast %2 : vector<1x16x128xbf16> to vector<16x128xbf16>
    %cst = arith.constant dense<0.000000e+00> : vector<8x128xf32>
    %4 = tpu.matmul %1, %3, %cst {dimension_numbers = #tpu.dot_dimension_numbers<[1], [0], [0], [1], [0, 0, 1, 1], [], []>} : vector<8x16xbf16>, vector<16x128xbf16>, vector<8x128xf32> -> vector<8x128xf32>
    %c0_4 = arith.constant 0 : index
    %c0_5 = arith.constant 0 : index
    %c0_6 = arith.constant 0 : index
    %5 = vector.load %arg3[%c0_4, %c0_5, %c0_6] : memref<3x1x128xbf16, #tpu.memory_space<vmem>>, vector<1x1x128xbf16>
    %6 = vector.shape_cast %5 : vector<1x1x128xbf16> to vector<1x128xbf16>
    %7 = arith.extf %6 : vector<1x128xbf16> to vector<1x128xf32>
    %8 = vector.broadcast %7 : vector<1x128xf32> to vector<8x128xf32>
    %9 = arith.addf %4, %8 : vector<8x128xf32>
    %10 = math.tanh %9 : vector<8x128xf32>
    %11 = arith.truncf %10 : vector<8x128xf32> to vector<8x128xbf16>
    %c1 = arith.constant 1 : index
    %c0_7 = arith.constant 0 : index
    %c0_8 = arith.constant 0 : index
    %12 = vector.load %arg2[%c1, %c0_7, %c0_8] : memref<3x128x128xbf16, #tpu.memory_space<vmem>>, vector<1x128x128xbf16>
    %13 = vector.shape_cast %12 : vector<1x128x128xbf16> to vector<128x128xbf16>
    %cst_9 = arith.constant dense<0.000000e+00> : vector<8x128xf32>
    %14 = tpu.matmul %11, %13, %cst_9 {dimension_numbers = #tpu.dot_dimension_numbers<[1], [0], [0], [1], [0, 0, 1, 1], [], []>} : vector<8x128xbf16>, vector<128x128xbf16>, vector<8x128xf32> -> vector<8x128xf32>
    %c1_10 = arith.constant 1 : index
    %c0_11 = arith.constant 0 : index
    %c0_12 = arith.constant 0 : index
    %15 = vector.load %arg3[%c1_10, %c0_11, %c0_12] : memref<3x1x128xbf16, #tpu.memory_space<vmem>>, vector<1x1x128xbf16>
    %16 = vector.shape_cast %15 : vector<1x1x128xbf16> to vector<1x128xbf16>
    %17 = arith.extf %16 : vector<1x128xbf16> to vector<1x128xf32>
    %18 = vector.broadcast %17 : vector<1x128xf32> to vector<8x128xf32>
    %19 = arith.addf %14, %18 : vector<8x128xf32>
    %20 = math.tanh %19 : vector<8x128xf32>
    %21 = arith.truncf %20 : vector<8x128xf32> to vector<8x128xbf16>
    %c2 = arith.constant 2 : index
    %c0_13 = arith.constant 0 : index
    %c0_14 = arith.constant 0 : index
    %22 = vector.load %arg2[%c2, %c0_13, %c0_14] : memref<3x128x128xbf16, #tpu.memory_space<vmem>>, vector<1x128x128xbf16>
    %23 = vector.shape_cast %22 : vector<1x128x128xbf16> to vector<128x128xbf16>
    %cst_15 = arith.constant dense<0.000000e+00> : vector<8x128xf32>
    %24 = tpu.matmul %21, %23, %cst_15 {dimension_numbers = #tpu.dot_dimension_numbers<[1], [0], [0], [1], [0, 0, 1, 1], [], []>} : vector<8x128xbf16>, vector<128x128xbf16>, vector<8x128xf32> -> vector<8x128xf32>
    %c2_16 = arith.constant 2 : index
    %c0_17 = arith.constant 0 : index
    %c0_18 = arith.constant 0 : index
    %25 = vector.load %arg3[%c2_16, %c0_17, %c0_18] : memref<3x1x128xbf16, #tpu.memory_space<vmem>>, vector<1x1x128xbf16>
    %26 = vector.shape_cast %25 : vector<1x1x128xbf16> to vector<1x128xbf16>
    %27 = arith.extf %26 : vector<1x128xbf16> to vector<1x128xf32>
    %28 = vector.broadcast %27 : vector<1x128xf32> to vector<8x128xf32>
    %29 = arith.addf %24, %28 : vector<8x128xf32>
    %30 = tpu.iota {dimensions = array<i32: 1>} : vector<8x128xi32>
    %c4_i32 = arith.constant 4 : i32
    %31 = vector.broadcast %c4_i32 : i32 to vector<8x128xi32>
    %32 = arith.cmpi sge, %30, %31 : vector<8x128xi32>
    %c8_i32 = arith.constant 8 : i32
    %33 = vector.broadcast %c8_i32 : i32 to vector<8x128xi32>
    %34 = arith.cmpi slt, %30, %33 : vector<8x128xi32>
    %35 = arith.andi %32, %34 : vector<8x128xi1>
    %cst_19 = arith.constant -5.000000e+00 : f32
    %cst_20 = arith.constant 2.000000e+00 : f32
    %36 = vector.broadcast %cst_19 : f32 to vector<8x128xf32>
    %37 = arith.maximumf %36, %29 : vector<8x128xf32>
    %38 = vector.broadcast %cst_20 : f32 to vector<8x128xf32>
    %39 = arith.minimumf %38, %37 : vector<8x128xf32>
    %40 = math.exp %39 : vector<8x128xf32>
    %41 = arith.select %35, %40, %29 : vector<8x128xi1>, vector<8x128xf32>
    %c0_21 = arith.constant 0 : index
    %c0_22 = arith.constant 0 : index
    %42 = vector.load %arg4[%c0_21, %c0_22] : memref<8x128xf32, #tpu.memory_space<vmem>>, vector<8x128xf32>
    tpu.vector_store %arg4[%c0_21, %c0_22], %41 {strides = array<i32>} : memref<8x128xf32, #tpu.memory_space<vmem>>, vector<8x128xf32>,
    return
  }
  func.func @transform_0(%arg0: i32) -> (i32, i32) {
    %c0_i32 = arith.constant 0 : i32
    %c0_i32_0 = arith.constant 0 : i32
    return %arg0, %c0_i32 : i32, i32
  }
  func.func @transform_1(%arg0: i32) -> (i32, i32, i32) {
    %c0_i32 = arith.constant 0 : i32
    %c0_i32_0 = arith.constant 0 : i32
    %c0_i32_1 = arith.constant 0 : i32
    %c0_i32_2 = arith.constant 0 : i32
    return %c0_i32, %c0_i32_0, %c0_i32_1 : i32, i32, i32
  }
  func.func @transform_2(%arg0: i32) -> (i32, i32, i32) {
    %c0_i32 = arith.constant 0 : i32
    %c0_i32_0 = arith.constant 0 : i32
    %c0_i32_1 = arith.constant 0 : i32
    %c0_i32_2 = arith.constant 0 : i32
    return %c0_i32, %c0_i32_0, %c0_i32_1 : i32, i32, i32
  }
  func.func @transform_3(%arg0: i32) -> (i32, i32) {
    %c0_i32 = arith.constant 0 : i32
    %c0_i32_0 = arith.constant 0 : i32
    return %arg0, %c0_i32 : i32, i32
  }
}

</mosaic_0001>

<llo_original>
// kernel: actor_critic_forward.1
$region0: #{actor_critic_forward.1}
  #allocation0 [shape = 'u32[]', space=smem, size = 0x4, offset = 0x4, fixed_abs, tag = 'smem constant byte address 0x4 - core index']
  #allocation1 [shape = 'u32[144,128]{1,0:T(1,128)}', space=vmem, size = 0x12000, scoped, tag = 'internal scratch']
  %s0 = inlined_call_operand.hbm [shape: f32[8,16], index: 0, kind: input, shape index: {}]
  %s1 = inlined_call_operand.hbm [shape: bf16[3,128,128], index: 1, kind: input, shape index: {}]
  %s2 = inlined_call_operand.vmem [shape: bf16[3,1,128], index: 2, kind: input, shape index: {}]
  %s3 = inlined_call_operand.hbm [shape: f32[8,128], index: 3, kind: output, shape index: {}]
  %s4 = sld [smem:[#allocation0]]
  $region30: #{actor_critic_forward.1} parent=0
    _
  %s6 = ssub.s32 1, %s4
  %s7 = scalar_select 0, %s6, %s4
  $region1: #{actor_critic_forward.1} parent=0
    #allocation2 [shape = 'u8[4096]{0}', space=vmem, size = 0x1000, scoped, tag = 'input window, operand 0, single buffered']
    #allocation3 [shape = 's32[1]{0}', space=sflag, size = 0x4, scoped, tag = 'scoped memory for actor_critic_forward.1']
    #allocation4 [shape = 's32[1]{0}', space=sflag, size = 0x4, scoped, tag = 'scoped memory for actor_critic_forward.1']
    #allocation5 [shape = 'u8[98304]{0}', space=vmem, size = 0x18000, scoped, tag = 'input window, operand 1, single buffered']
    #allocation6 [shape = 's32[1]{0}', space=sflag, size = 0x4, scoped, tag = 'scoped memory for actor_critic_forward.1']
    #allocation7 [shape = 'u8[4096]{0}', space=vmem, size = 0x1000, scoped, tag = 'output window, operand 0, single buffered']
    %8 = vsyncpa [#allocation3], 0
    %9 = vsyncpa [#allocation6], 0
    %10 = vsyncpa [#allocation4], 0
    // Predicated region
    $region2: #{actor_critic_forward.1} parent=1 // pred_check
      _
    $region3: #{actor_critic_forward.1} parent=1 // pred_check_branch
      %12 = sbr.rel (0) target = $region5
    $region4: #{actor_critic_forward.1} parent=1 // pred_region
      %s14 = ssub.s32 128, 128
      %15 = vsyncadd [#allocation3], %s14
      %s17 = sshll.u32 [#allocation2], 4
      %s18 = int_to_ptr.vmem [resolvable:$true] %s17
      %20 = dma.hbm_to_vmem [thread:$0]  %s0, 128, %s18, [#allocation3]
    $region5: #{actor_critic_forward.1} parent=1 // pred_fallthru
      _
    // Predicated region
    $region6: #{actor_critic_forward.1} parent=1 // pred_check
      _
    $region7: #{actor_critic_forward.1} parent=1 // pred_check_branch
      %22 = sbr.rel (0) target = $region9
    $region8: #{actor_critic_forward.1} parent=1 // pred_region
      %s24 = ssub.s32 3072, 3072
      %25 = vsyncadd [#allocation6], %s24
      %s26 = sshll.u32 [#allocation5], 4
      %s27 = int_to_ptr.vmem [resolvable:$true] %s26
      %32 = dma.hbm_to_vmem [thread:$0]  %s1, 3072, %s27, [#allocation6], 64, 64, 4
    $region9: #{actor_critic_forward.1} parent=1 // pred_fallthru
      _
    // Predicated region
    $region10: #{actor_critic_forward.1} parent=1 // pred_check
      _
    $region11: #{actor_critic_forward.1} parent=1 // pred_check_branch
      %34 = sbr.rel (0) target = $region13
    $region12: #{actor_critic_forward.1} parent=1 // pred_region
      _
    $region13: #{actor_critic_forward.1} parent=1 // pred_fallthru
      _
    // Predicated region
    $region14: #{actor_critic_forward.1} parent=1 // pred_check
      _
    $region15: #{actor_critic_forward.1} parent=1 // pred_check_branch
      %36 = sbr.rel (0) target = $region17
    $region16: #{actor_critic_forward.1} parent=1 // pred_region
      %37 = dma.done [#allocation3], 128
    $region17: #{actor_critic_forward.1} parent=1 // pred_fallthru
      _
    // Predicated region
    $region18: #{actor_critic_forward.1} parent=1 // pred_check
      _
    $region19: #{actor_critic_forward.1} parent=1 // pred_check_branch
      %39 = sbr.rel (0) target = $region21
    $region20: #{actor_critic_forward.1} parent=1 // pred_region
      %40 = dma.done [#allocation6], 3072
    $region21: #{actor_critic_forward.1} parent=1 // pred_fallthru
      _
    %v42 = vld [vmem:[#allocation2] sm:$0xff]
    %v43 = vpack.c.bf16 %v42, %v42
    %v44 = vld [vmem:[#allocation5] sm:$0xf]
    %v45 = vld [vmem:[#allocation5 + $0x4] sm:$0xf]
    %v46 = vld [vmem:[%s2] sm:$0x1]
    %v47 = vunpack.c.l.bf16 %v46
    %v48 = vlaneseq
    %v49 = vshrl.u32 %v48, 7
    %v50 = vsub.s32 0, %v49
    %v51 = vrot.slane %v47, %v50
    %v54 = vunpack.c.l.b16 %v44
    %v55 = vunpack.c.l.b16 %v45
    %v56 = vpack.c.b16 %v55, %v54
    %vm58 = vcmask 130048
    %v60 = vsel %vm58, %v43, 0
    %62 = vmatprep.subr.bf16.mxu0 0
    %63 = vmatpush1.bf16.msra.mxu0 %v56
    %64 = vmatprep.subr.bf16.mxu0 0
    %65 = vmatpush1.bf16.msra.mxu0 0
    %66 = vmatprep.subr.bf16.mxu0 0
    %67 = vmatpush1.bf16.msra.mxu0 0
    %68 = vmatprep.subr.bf16.mxu0 0
    %69 = vmatpush1.bf16.msra.mxu0 0
    %70 = vmatprep.subr.bf16.mxu0 0
    %71 = vmatpush1.bf16.msra.mxu0 0
    %72 = vmatprep.subr.bf16.mxu0 0
    %73 = vmatpush1.bf16.msra.mxu0 0
    %74 = vmatprep.subr.bf16.mxu0 0
    %75 = vmatpush1.bf16.msra.mxu0 0
    %76 = vmatprep.subr.bf16.mxu0 0
    %77 = vmatpush1.bf16.msra.mxu0 0
    %78 = vmatprep.subr.bf16.mxu0 0
    %79 = vmatpush1.bf16.msra.mxu0 0
    %80 = vmatprep.subr.bf16.mxu0 0
    %81 = vmatpush1.bf16.msra.mxu0 0
    %82 = vmatprep.subr.bf16.mxu0 0
    %83 = vmatpush1.bf16.msra.mxu0 0
    %84 = vmatprep.subr.bf16.mxu0 0
    %85 = vmatpush1.bf16.msra.mxu0 0
    %86 = vmatprep.subr.bf16.mxu0 0
    %87 = vmatpush1.bf16.msra.mxu0 0
    %88 = vmatprep.subr.bf16.mxu0 0
    %89 = vmatpush1.bf16.msra.mxu0 0
    %90 = vmatprep.subr.bf16.mxu0 0
    %91 = vmatpush1.bf16.msra.mxu0 0
    %92 = vmatprep.subr.bf16.mxu0 0
    %93 = vmatpush1.bf16.msra.mxu0 0
    %94 = vmatprep.mubr.bf16.mxu0 0
    %95 = vmatmul.mubr.bf16.gmra.mrb[0].mxu0 %v60
    %v96 = vpop.f32.mrb[0].mxu0
    %v97 = vadd.f32 %v51, %v96
    %v98 = vpop.f32.mrb[0].mxu0
    %v99 = vpop.f32.mrb[0].mxu0
    %v100 = vpop.f32.mrb[0].mxu0
    %101 = vdwg.mxu0
    %v102 = vtanh.pop %v97
    %v103 = vpack.c.bf16 %v102, %v102
    %s104 = scalar_lea.vmem [#allocation5], 64
    %v105 = vld [vmem:[%s104] sm:$0xf]
    %v106 = vld [vmem:[%s104 + $0x4] sm:$0xf]
    %v107 = vld [vmem:[%s104 + $0x8] sm:$0xf]
    %v108 = vld [vmem:[%s104 + $0xc] sm:$0xf]
    %v109 = vld [vmem:[%s104 + $0x10] sm:$0xf]
    %v110 = vld [vmem:[%s104 + $0x14] sm:$0xf]
    %v111 = vld [vmem:[%s104 + $0x18] sm:$0xf]
    %v112 = vld [vmem:[%s104 + $0x1c] sm:$0xf]
    %v113 = vld [vmem:[%s104 + $0x20] sm:$0xf]
    %v114 = vld [vmem:[%s104 + $0x24] sm:$0xf]
    %v115 = vld [vmem:[%s104 + $0x28] sm:$0xf]
    %v116 = vld [vmem:[%s104 + $0x2c] sm:$0xf]
    %v117 = vld [vmem:[%s104 + $0x30] sm:$0xf]
    %v118 = vld [vmem:[%s104 + $0x34] sm:$0xf]
    %v119 = vld [vmem:[%s104 + $0x38] sm:$0xf]
    %v120 = vld [vmem:[%s104 + $0x3c] sm:$0xf]
    %s121 = scalar_lea.vmem %s2, 1
    %v122 = vld [vmem:[%s121] sm:$0x1]
    %v123 = vunpack.c.l.bf16 %v122
    %v124 = vlaneseq
    %v125 = vshrl.u32 %v124, 7
    %v126 = vsub.s32 0, %v125
    %v127 = vrot.slane %v123, %v126
    %v144 = vunpack.c.l.b16 %v105
    %v145 = vunpack.c.l.b16 %v106
    %v146 = vunpack.c.l.b16 %v107
    %v147 = vunpack.c.l.b16 %v108
    %v148 = vunpack.c.l.b16 %v109
    %v149 = vunpack.c.l.b16 %v110
    %v150 = vunpack.c.l.b16 %v111
    %v151 = vunpack.c.l.b16 %v112
    %v152 = vunpack.c.l.b16 %v113
    %v153 = vunpack.c.l.b16 %v114
    %v154 = vunpack.c.l.b16 %v115
    %v155 = vunpack.c.l.b16 %v116
    %v156 = vunpack.c.l.b16 %v117
    %v157 = vunpack.c.l.b16 %v118
    %v158 = vunpack.c.l.b16 %v119
    %v159 = vunpack.c.l.b16 %v120
    %v160 = vpack.c.b16 %v145, %v144
    %v161 = vpack.c.b16 %v147, %v146
    %v162 = vpack.c.b16 %v149, %v148
    %v163 = vpack.c.b16 %v151, %v150
    %v164 = vpack.c.b16 %v153, %v152
    %v165 = vpack.c.b16 %v155, %v154
    %v166 = vpack.c.b16 %v157, %v156
    %v167 = vpack.c.b16 %v159, %v158
    %176 = vmatprep.subr.bf16.mxu0 0
    %177 = vmatpush1.bf16.msra.mxu0 %v160
    %178 = vmatprep.subr.bf16.mxu0 0
    %179 = vmatpush1.bf16.msra.mxu0 %v161
    %180 = vmatprep.subr.bf16.mxu0 0
    %181 = vmatpush1.bf16.msra.mxu0 %v162
    %182 = vmatprep.subr.bf16.mxu0 0
    %183 = vmatpush1.bf16.msra.mxu0 %v163
    %184 = vmatprep.subr.bf16.mxu0 0
    %185 = vmatpush1.bf16.msra.mxu0 %v164
    %186 = vmatprep.subr.bf16.mxu0 0
    %187 = vmatpush1.bf16.msra.mxu0 %v165
    %188 = vmatprep.subr.bf16.mxu0 0
    %189 = vmatpush1.bf16.msra.mxu0 %v166
    %190 = vmatprep.subr.bf16.mxu0 0
    %191 = vmatpush1.bf16.msra.mxu0 %v167
    %192 = vmatprep.subr.bf16.mxu0 0
    %193 = vmatpush1.bf16.msra.mxu0 0
    %194 = vmatprep.subr.bf16.mxu0 0
    %195 = vmatpush1.bf16.msra.mxu0 0
    %196 = vmatprep.subr.bf16.mxu0 0
    %197 = vmatpush1.bf16.msra.mxu0 0
    %198 = vmatprep.subr.bf16.mxu0 0
    %199 = vmatpush1.bf16.msra.mxu0 0
    %200 = vmatprep.subr.bf16.mxu0 0
    %201 = vmatpush1.bf16.msra.mxu0 0
    %202 = vmatprep.subr.bf16.mxu0 0
    %203 = vmatpush1.bf16.msra.mxu0 0
    %204 = vmatprep.subr.bf16.mxu0 0
    %205 = vmatpush1.bf16.msra.mxu0 0
    %206 = vmatprep.subr.bf16.mxu0 0
    %207 = vmatpush1.bf16.msra.mxu0 0
    %208 = vmatprep.mubr.bf16.mxu0 0
    %209 = vmatmul.mubr.bf16.gmra.mrb[0].mxu0 %v103
    %v210 = vpop.f32.mrb[0].mxu0
    %v211 = vadd.f32 %v127, %v210
    %v212 = vpop.f32.mrb[0].mxu0
    %v213 = vpop.f32.mrb[0].mxu0
    %v214 = vpop.f32.mrb[0].mxu0
    %215 = vdwg.mxu0
    %v216 = vtanh.pop %v211
    %v217 = vpack.c.bf16 %v216, %v216
    %s218 = scalar_lea.vmem [#allocation5], 128
    %v219 = vld [vmem:[%s218] sm:$0xf]
    %v220 = vld [vmem:[%s218 + $0x4] sm:$0xf]
    %v221 = vld [vmem:[%s218 + $0x8] sm:$0xf]
    %v222 = vld [vmem:[%s218 + $0xc] sm:$0xf]
    %v223 = vld [vmem:[%s218 + $0x10] sm:$0xf]
    %v224 = vld [vmem:[%s218 + $0x14] sm:$0xf]
    %v225 = vld [vmem:[%s218 + $0x18] sm:$0xf]
    %v226 = vld [vmem:[%s218 + $0x1c] sm:$0xf]
    %v227 = vld [vmem:[%s218 + $0x20] sm:$0xf]
    %v228 = vld [vmem:[%s218 + $0x24] sm:$0xf]
    %v229 = vld [vmem:[%s218 + $0x28] sm:$0xf]
    %v230 = vld [vmem:[%s218 + $0x2c] sm:$0xf]
    %v231 = vld [vmem:[%s218 + $0x30] sm:$0xf]
    %v232 = vld [vmem:[%s218 + $0x34] sm:$0xf]
    %v233 = vld [vmem:[%s218 + $0x38] sm:$0xf]
    %v234 = vld [vmem:[%s218 + $0x3c] sm:$0xf]
    %s235 = scalar_lea.vmem %s2, 2
    %v236 = vld [vmem:[%s235] sm:$0x1]
    %v237 = vunpack.c.l.bf16 %v236
    %v238 = vlaneseq
    %v239 = vshrl.u32 %v238, 7
    %v240 = vsub.s32 0, %v239
    %v241 = vrot.slane %v237, %v240
    %v258 = vunpack.c.l.b16 %v219
    %v259 = vunpack.c.l.b16 %v220
    %v260 = vunpack.c.l.b16 %v221
    %v261 = vunpack.c.l.b16 %v222
    %v262 = vunpack.c.l.b16 %v223
    %v263 = vunpack.c.l.b16 %v224
    %v264 = vunpack.c.l.b16 %v225
    %v265 = vunpack.c.l.b16 %v226
    %v266 = vunpack.c.l.b16 %v227
    %v267 = vunpack.c.l.b16 %v228
    %v268 = vunpack.c.l.b16 %v229
    %v269 = vunpack.c.l.b16 %v230
    %v270 = vunpack.c.l.b16 %v231
    %v271 = vunpack.c.l.b16 %v232
    %v272 = vunpack.c.l.b16 %v233
    %v273 = vunpack.c.l.b16 %v234
    %v274 = vpack.c.b16 %v259, %v258
    %v275 = vpack.c.b16 %v261, %v260
    %v276 = vpack.c.b16 %v263, %v262
    %v277 = vpack.c.b16 %v265, %v264
    %v278 = vpack.c.b16 %v267, %v266
    %v279 = vpack.c.b16 %v269, %v268
    %v280 = vpack.c.b16 %v271, %v270
    %v281 = vpack.c.b16 %v273, %v272
    %290 = vmatprep.subr.bf16.mxu0 0
    %291 = vmatpush1.bf16.msra.mxu0 %v274
    %292 = vmatprep.subr.bf16.mxu0 0
    %293 = vmatpush1.bf16.msra.mxu0 %v275
    %294 = vmatprep.subr.bf16.mxu0 0
    %295 = vmatpush1.bf16.msra.mxu0 %v276
    %296 = vmatprep.subr.bf16.mxu0 0
    %297 = vmatpush1.bf16.msra.mxu0 %v277
    %298 = vmatprep.subr.bf16.mxu0 0
    %299 = vmatpush1.bf16.msra.mxu0 %v278
    %300 = vmatprep.subr.bf16.mxu0 0
    %301 = vmatpush1.bf16.msra.mxu0 %v279
    %302 = vmatprep.subr.bf16.mxu0 0
    %303 = vmatpush1.bf16.msra.mxu0 %v280
    %304 = vmatprep.subr.bf16.mxu0 0
    %305 = vmatpush1.bf16.msra.mxu0 %v281
    %306 = vmatprep.subr.bf16.mxu0 0
    %307 = vmatpush1.bf16.msra.mxu0 0
    %308 = vmatprep.subr.bf16.mxu0 0
    %309 = vmatpush1.bf16.msra.mxu0 0
    %310 = vmatprep.subr.bf16.mxu0 0
    %311 = vmatpush1.bf16.msra.mxu0 0
    %312 = vmatprep.subr.bf16.mxu0 0
    %313 = vmatpush1.bf16.msra.mxu0 0
    %314 = vmatprep.subr.bf16.mxu0 0
    %315 = vmatpush1.bf16.msra.mxu0 0
    %316 = vmatprep.subr.bf16.mxu0 0
    %317 = vmatpush1.bf16.msra.mxu0 0
    %318 = vmatprep.subr.bf16.mxu0 0
    %319 = vmatpush1.bf16.msra.mxu0 0
    %320 = vmatprep.subr.bf16.mxu0 0
    %321 = vmatpush1.bf16.msra.mxu0 0
    %322 = vmatprep.mubr.bf16.mxu0 0
    %323 = vmatmul.mubr.bf16.gmra.mrb[0].mxu0 %v217
    %v324 = vpop.f32.mrb[0].mxu0
    %v325 = vadd.f32 %v241, %v324
    %v326 = vpop.f32.mrb[0].mxu0
    %v327 = vpop.f32.mrb[0].mxu0
    %v328 = vpop.f32.mrb[0].mxu0
    %329 = vdwg.mxu0
    %v330 = vlaneseq
    %v331 = vand.u32 %v330, 127
    %vm332 = vcmp.ge.s32.totalorder %v331, 4
    %vm333 = vcmp.lt.s32.totalorder %v331, 8
    %vm334 = vmand %vm332, %vm333
    %v335 = vmax.f32 %v325, -5.0
    %v336 = vmin.f32 %v335, 2.0
    %v337 = vmul.f32 %v336, 1.442695
    %v338 = vpow.pop %v337
    %v339 = vsel %vm334, %v338, %v325
    %340 = vst [vmem:[#allocation7] sm:$0xff] %v339
    // Predicated region
    $region22: #{actor_critic_forward.1} parent=1 // pred_check
      _
    $region23: #{actor_critic_forward.1} parent=1 // pred_check_branch
      %342 = sbr.rel (0) target = $region25
    $region24: #{actor_critic_forward.1} parent=1 // pred_region
      %s344 = ssub.s32 128, 128
      %345 = vsyncadd [#allocation4], %s344
      %s347 = sshll.u32 [#allocation7], 4
      %s348 = int_to_ptr.vmem [resolvable:$true] %s347
      %350 = dma.vmem_to_hbm [thread:$0]  %s348, 128, %s3, [#allocation4]
    $region25: #{actor_critic_forward.1} parent=1 // pred_fallthru
      _
    // Predicated region
    $region26: #{actor_critic_forward.1} parent=1 // pred_check
      _
    $region27: #{actor_critic_forward.1} parent=1 // pred_check_branch
      %352 = sbr.rel (0) target = $region29
    $region28: #{actor_critic_forward.1} parent=1 // pred_region
      %353 = dma.done [#allocation4], 128
    $region29: #{actor_critic_forward.1} parent=1 // pred_fallthru
      _
    %354 = vsyncpa [#allocation3], 1
    %355 = vsyncpa [#allocation6], 1
    %356 = vsyncpa [#allocation4], 1

</llo_original>
